<compile_context>
chip_gen: v6e
topology: v6e:2x2x1
jax: 0.10.0
libtpu: 0.0.40
codegen_flags: <defaults>
</compile_context>

<pallas_src>
import jax
import jax.numpy as jnp
from jax.experimental import pallas as pl
from jax.experimental.pallas import tpu as pltpu


def model_kernel(x_ref, w_ref, b_ref, o_ref):
    # x_ref: (TN, 2, TL) VMEM block straight from the natural (N, 2, L) layout.
    # w_ref: (2, 2) SMEM ; b_ref: (2,) SMEM ; o_ref: (TN, TL) VMEM.
    x0 = x_ref[:, 0, :]          # channel 0 slab, (TN, TL)
    x1 = x_ref[:, 1, :]          # channel 1 slab, (TN, TL)

    w00 = w_ref[0, 0]
    w01 = w_ref[0, 1]
    w10 = w_ref[1, 0]
    w11 = w_ref[1, 1]
    b0 = b_ref[0]
    b1 = b_ref[1]

    # Linear(2, 2) at every (n, l): y_j = x0 * W[j, 0] + x1 * W[j, 1] + b[j]
    # Kept on the VPU (K=2 would waste a full MXU pass).
    y0 = x0 * w00 + x1 * w01 + b0      # (TN, TL)
    y1 = x0 * w10 + x1 * w11 + b1      # (TN, TL)

    # Identity + eval-mode Dropout are no-ops.
    # MaxPool1d(kernel_size=2) over the size-2 feature axis -> single max.
    # AdaptiveAvgPool1d((1,)) over a length-1 axis is the identity.
    o_ref[...] = jnp.maximum(y0, y1).astype(o_ref.dtype)


def _pick_tiles(N, L):
    """Lane-dense tiles; no padding required (cdiv grid handles ragged edges)."""
    TN = N if N <= 128 else 128              # leading dim of x block / sublane dim of out
    if L <= 128:
        TL = L                               # full-extent lane dim satisfies tiling rule
    else:
        TL = min(2048, (L // 128) * 128)     # multiple of 128, capped for VMEM budget
    gn, gl = pl.cdiv(N, TN), pl.cdiv(L, TL)
    # v7x megacore: ensure >= 2 blocks total by splitting L when possible.
    if gn * gl == 1 and TL >= 256:
        TL = max(128, (TL // 2) // 128 * 128)
        gl = pl.cdiv(L, TL)
    return TN, TL, gn, gl


def model_forward(x, weight, bias):
    """x: (N, 2, L) float32; weight: (2, 2); bias: (2,). Returns (N, L, 1)."""
    N, C, L = x.shape
    assert C == 2, "Linear(2, 2) requires 2 input channels"

    TN, TL, gn, gl = _pick_tiles(N, L)

    out = pl.pallas_call(
        model_kernel,
        out_shape=jax.ShapeDtypeStruct((N, L), x.dtype),
        grid=(gn, gl),
        in_specs=[
            # Natural (N, 2, L) layout: last two block dims are (2, TL);
            # 2 == full channel extent, TL is a multiple of 128 (or full L).
            pl.BlockSpec((TN, 2, TL), lambda i, j: (i, 0, j)),
            pl.BlockSpec(memory_space=pltpu.MemorySpace.SMEM),   # weight (2, 2)
            pl.BlockSpec(memory_space=pltpu.MemorySpace.SMEM),   # bias (2,)
        ],
        out_specs=pl.BlockSpec((TN, TL), lambda i, j: (i, j)),
        compiler_params=pltpu.CompilerParams(
            dimension_semantics=("parallel", "parallel"),
            vmem_limit_bytes=32 << 20,   # covers double-buffered max tile on all gens
        ),
    )(x, weight, bias)

    # Trailing singleton axis (MaxPool1d/AdaptiveAvgPool1d) is a free metadata reshape.
    return out[..., None]


def reference_forward(x, weight, bias):
    v1 = jnp.transpose(x, (0, 2, 1))                     # (N, L, 2)
    v2 = jnp.einsum("nlc,jc->nlj", v1, weight) + bias    # (N, L, 2)
    v6 = jnp.max(v2, axis=-1, keepdims=True)             # (N, L, 1)
    return v6                                            # avg over len-1 axis = identity


if __name__ == "__main__":
    key = jax.random.PRNGKey(0)
    kx, kw, kb, kx2, kx3 = jax.random.split(key, 5)

    # Deterministic Linear(2, 2) parameters (PyTorch-style uniform init range).
    bound = 1.0 / jnp.sqrt(2.0)
    weight = jax.random.uniform(kw, (2, 2), jnp.float32, -bound, bound)
    bias = jax.random.uniform(kb, (2,), jnp.float32, -bound, bound)

    # 1) Small shape consistent with the module: (N, C=2, L)
    N, C, L = 2, 2, 8
    x = jax.random.normal(kx, (N, C, L), dtype=jnp.float32)
    out = jax.block_until_ready(model_forward(x, weight, bias))
    ref = reference_forward(x, weight, bias)
    assert out.shape == (N, L, 1), out.shape
    assert jnp.allclose(out, ref, atol=1e-5, rtol=1e-5), "mismatch vs reference"

    # 2) Multi-tile grid along L (exact blocks, megacore split path).
    N2, L2 = 10, 384
    x2 = jax.random.normal(kx2, (N2, C, L2), dtype=jnp.float32)
    out2 = jax.block_until_ready(model_forward(x2, weight, bias))
    ref2 = reference_forward(x2, weight, bias)
    assert out2.shape == (N2, L2, 1), out2.shape
    assert jnp.allclose(out2, ref2, atol=1e-5, rtol=1e-5), "mismatch vs reference (tiled)"

    # 3) Ragged edge block (L not a multiple of TL) with no pad / no slice.
    N3, L3 = 9, 500
    x3 = jax.random.normal(kx3, (N3, C, L3), dtype=jnp.float32)
    out3 = jax.block_until_ready(model_forward(x3, weight, bias))
    ref3 = reference_forward(x3, weight, bias)
    assert out3.shape == (N3, L3, 1), out3.shape
    assert jnp.allclose(out3, ref3, atol=1e-5, rtol=1e-5), "mismatch vs reference (ragged)"

    print("KERNEL_OK")
</pallas_src>

<mosaic_0001>
module attributes {stable_mosaic.version = 11 : i64} {
  func.func @model_kernel(%arg0: i32, %arg1: i32, %arg2: memref<2x2x8xf32, #tpu.memory_space<vmem>>, %arg3: memref<2x2xf32, #tpu.memory_space<smem>>, %arg4: memref<2xf32, #tpu.memory_space<smem>>, %arg5: memref<2x8xf32, #tpu.memory_space<vmem>>) attributes {dimension_semantics = [#tpu.dimension_semantics<parallel>, #tpu.dimension_semantics<parallel>], iteration_bounds = array<i64: 1, 1>, scalar_prefetch = 0 : i64, scratch_operands = 0 : i64, tpu.core_type = #tpu.core_type<tc>, window_params = [{transform_indices = @transform_0, window_bounds = array<i64: 2, 2, 8>}, {transform_indices = @transform_1, window_bounds = array<i64: 2, 2>}, {transform_indices = @transform_2, window_bounds = array<i64: 2>}, {transform_indices = @transform_3, window_bounds = array<i64: 2, 8>}]} {
    %c0 = arith.constant 0 : index
    %c0_0 = arith.constant 0 : index
    %c0_1 = arith.constant 0 : index
    %0 = vector.load %arg2[%c0, %c0_0, %c0_1] : memref<2x2x8xf32, #tpu.memory_space<vmem>>, vector<2x1x8xf32>
    %1 = vector.shape_cast %0 : vector<2x1x8xf32> to vector<2x8xf32>
    %c0_2 = arith.constant 0 : index
    %c1 = arith.constant 1 : index
    %c0_3 = arith.constant 0 : index
    %2 = vector.load %arg2[%c0_2, %c1, %c0_3] : memref<2x2x8xf32, #tpu.memory_space<vmem>>, vector<2x1x8xf32>
    %3 = vector.shape_cast %2 : vector<2x1x8xf32> to vector<2x8xf32>
    %c0_4 = arith.constant 0 : index
    %c0_5 = arith.constant 0 : index
    %4 = memref.load %arg3[%c0_4, %c0_5] : memref<2x2xf32, #tpu.memory_space<smem>>
    %c0_6 = arith.constant 0 : index
    %c1_7 = arith.constant 1 : index
    %5 = memref.load %arg3[%c0_6, %c1_7] : memref<2x2xf32, #tpu.memory_space<smem>>
    %c1_8 = arith.constant 1 : index
    %c0_9 = arith.constant 0 : index
    %6 = memref.load %arg3[%c1_8, %c0_9] : memref<2x2xf32, #tpu.memory_space<smem>>
    %c1_10 = arith.constant 1 : index
    %c1_11 = arith.constant 1 : index
    %7 = memref.load %arg3[%c1_10, %c1_11] : memref<2x2xf32, #tpu.memory_space<smem>>
    %c0_12 = arith.constant 0 : index
    %8 = memref.load %arg4[%c0_12] : memref<2xf32, #tpu.memory_space<smem>>
    %c1_13 = arith.constant 1 : index
    %9 = memref.load %arg4[%c1_13] : memref<2xf32, #tpu.memory_space<smem>>
    %10 = vector.broadcast %4 : f32 to vector<2x8xf32>
    %11 = arith.mulf %1, %10 : vector<2x8xf32>
    %12 = vector.broadcast %5 : f32 to vector<2x8xf32>
    %13 = arith.mulf %3, %12 : vector<2x8xf32>
    %14 = arith.addf %11, %13 : vector<2x8xf32>
    %15 = vector.broadcast %8 : f32 to vector<2x8xf32>
    %16 = arith.addf %14, %15 : vector<2x8xf32>
    %17 = vector.broadcast %6 : f32 to vector<2x8xf32>
    %18 = arith.mulf %1, %17 : vector<2x8xf32>
    %19 = vector.broadcast %7 : f32 to vector<2x8xf32>
    %20 = arith.mulf %3, %19 : vector<2x8xf32>
    %21 = arith.addf %18, %20 : vector<2x8xf32>
    %22 = vector.broadcast %9 : f32 to vector<2x8xf32>
    %23 = arith.addf %21, %22 : vector<2x8xf32>
    %24 = arith.maximumf %16, %23 : vector<2x8xf32>
    %c0_14 = arith.constant 0 : index
    %c0_15 = arith.constant 0 : index
    %25 = vector.load %arg5[%c0_14, %c0_15] : memref<2x8xf32, #tpu.memory_space<vmem>>, vector<2x8xf32>
    tpu.vector_store %arg5[%c0_14, %c0_15], %24 {strides = array<i32>} : memref<2x8xf32, #tpu.memory_space<vmem>>, vector<2x8xf32>,
    return
  }
  func.func @transform_0(%arg0: i32, %arg1: i32) -> (i32, i32, i32) {
    %c0_i32 = arith.constant 0 : i32
    %c0_i32_0 = arith.constant 0 : i32
    return %arg0, %c0_i32, %arg1 : i32, i32, i32
  }
  func.func @transform_1(%arg0: i32, %arg1: i32) -> (i32, i32) {
    %c0_i32 = arith.constant 0 : i32
    %c0_i32_0 = arith.constant 0 : i32
    %c0_i32_1 = arith.constant 0 : i32
    return %c0_i32, %c0_i32_0 : i32, i32
  }
  func.func @transform_2(%arg0: i32, %arg1: i32) -> i32 {
    %c0_i32 = arith.constant 0 : i32
    %c0_i32_0 = arith.constant 0 : i32
    return %c0_i32 : i32
  }
  func.func @transform_3(%arg0: i32, %arg1: i32) -> (i32, i32) {
    %c0_i32 = arith.constant 0 : i32
    return %arg0, %arg1 : i32, i32
  }
}

</mosaic_0001>

<llo_original>
// kernel: tpu_custom_call.1
$region0: #{tpu_custom_call.1}
  #allocation0 [shape = 'u32[]', space=smem, size = 0x4, offset = 0x4, fixed_abs, tag = 'smem constant byte address 0x4 - core index']
  #allocation1 [shape = 'u32[144,128]{1,0:T(1,128)}', space=vmem, size = 0x12000, scoped, tag = 'internal scratch']
  %s0 = inlined_call_operand.hbm [shape: f32[2,2,8], index: 0, kind: input, shape index: {}]
  %s1 = inlined_call_operand.hbm [shape: f32[2,2], index: 1, kind: input, shape index: {}]
  %s2 = inlined_call_operand.vmem [shape: f32[2], index: 2, kind: input, shape index: {}]
  %s3 = inlined_call_operand.hbm [shape: f32[2,8], index: 3, kind: output, shape index: {}]
  %s4 = sld [smem:[#allocation0]]
  $region34: #{tpu_custom_call.1} parent=0
    _
  %s6 = ssub.s32 1, %s4
  %s7 = scalar_select 0, %s6, %s4
  $region1: #{tpu_custom_call.1} parent=0
    #allocation2 [shape = 'u8[2048]{0}', space=vmem, size = 0x800, scoped, tag = 'input window, operand 0, single buffered']
    #allocation3 [shape = 's32[1]{0}', space=sflag, size = 0x4, scoped, tag = 'scoped memory for tpu_custom_call.1']
    #allocation4 [shape = 's32[1]{0}', space=sflag, size = 0x4, scoped, tag = 'scoped memory for tpu_custom_call.1']
    #allocation5 [shape = 's32[1]{0}', space=sflag, size = 0x4, scoped, tag = 'scoped memory for tpu_custom_call.1']
    #allocation6 [shape = 's32[1]{0}', space=sflag, size = 0x4, scoped, tag = 'scoped memory for tpu_custom_call.1']
    #allocation7 [shape = 'u8[1024]{0}', space=smem, size = 0x400, scoped, tag = 'input window, operand 1, single buffered']
    #allocation8 [shape = 'u8[512]{0}', space=smem, size = 0x200, scoped, tag = 'input window, operand 2, single buffered']
    #allocation9 [shape = 'u8[1024]{0}', space=vmem, size = 0x400, scoped, tag = 'output window, operand 0, single buffered']
    %8 = vsyncpa [#allocation3], 0
    %9 = vsyncpa [#allocation5], 0
    %10 = vsyncpa [#allocation6], 0
    %11 = vsyncpa [#allocation4], 0
    // Predicated region
    $region2: #{tpu_custom_call.1} parent=1 // pred_check
      _
    $region3: #{tpu_custom_call.1} parent=1 // pred_check_branch
      %13 = sbr.rel (0) target = $region5
    $region4: #{tpu_custom_call.1} parent=1 // pred_region
      %s15 = ssub.s32 64, 64
      %16 = vsyncadd [#allocation3], %s15
      %s17 = sshll.u32 [#allocation2], 4
      %s18 = int_to_ptr.vmem [resolvable:$true] %s17
      %23 = dma.hbm_to_vmem [thread:$0]  %s0, 64, %s18, [#allocation3], 32, 32, 2
    $region5: #{tpu_custom_call.1} parent=1 // pred_fallthru
      _
    // Predicated region
    $region6: #{tpu_custom_call.1} parent=1 // pred_check
      _
    $region7: #{tpu_custom_call.1} parent=1 // pred_check_branch
      %25 = sbr.rel (0) target = $region9
    $region8: #{tpu_custom_call.1} parent=1 // pred_region
      %s27 = ssub.s32 32, 32
      %28 = vsyncadd [#allocation5], %s27
      %31 = dma.hbm_to_smem %s1, 32, [#allocation7], [#allocation5]
    $region9: #{tpu_custom_call.1} parent=1 // pred_fallthru
      _
    // Predicated region
    $region10: #{tpu_custom_call.1} parent=1 // pred_check
      _
    $region11: #{tpu_custom_call.1} parent=1 // pred_check_branch
      %33 = sbr.rel (0) target = $region13
    $region12: #{tpu_custom_call.1} parent=1 // pred_region
      %s35 = ssub.s32 16, 16
      %36 = vsyncadd [#allocation6], %s35
      %s38 = sshll.u32 %s2, 4
      %s39 = int_to_ptr.vmem [resolvable:$true] %s38
      %41 = dma.vmem_to_smem %s39, 16, [#allocation8], [#allocation6]
    $region13: #{tpu_custom_call.1} parent=1 // pred_fallthru
      _
    // Predicated region
    $region14: #{tpu_custom_call.1} parent=1 // pred_check
      _
    $region15: #{tpu_custom_call.1} parent=1 // pred_check_branch
      %43 = sbr.rel (0) target = $region17
    $region16: #{tpu_custom_call.1} parent=1 // pred_region
      %44 = dma.done [#allocation3], 64
    $region17: #{tpu_custom_call.1} parent=1 // pred_fallthru
      _
    // Predicated region
    $region18: #{tpu_custom_call.1} parent=1 // pred_check
      _
    $region19: #{tpu_custom_call.1} parent=1 // pred_check_branch
      %46 = sbr.rel (0) target = $region21
    $region20: #{tpu_custom_call.1} parent=1 // pred_region
      %47 = dma.done [#allocation5], 32
    $region21: #{tpu_custom_call.1} parent=1 // pred_fallthru
      _
    // Predicated region
    $region22: #{tpu_custom_call.1} parent=1 // pred_check
      _
    $region23: #{tpu_custom_call.1} parent=1 // pred_check_branch
      %49 = sbr.rel (0) target = $region25
    $region24: #{tpu_custom_call.1} parent=1 // pred_region
      %50 = dma.done [#allocation6], 16
    $region25: #{tpu_custom_call.1} parent=1 // pred_fallthru
      _
    %51 = sfence
    %v52 = vld [vmem:[#allocation2] sm:$0x1]
    %v53 = vld [vmem:[#allocation2 + $0x2] sm:$0x1]
    %v54 = vld [vmem:[#allocation2 + $0x1] sm:$0x1]
    %v55 = vld [vmem:[#allocation2 + $0x3] sm:$0x1]
    %s56 = sld [smem:[#allocation7]]
    %s57 = sld [smem:[#allocation7 + $0x1]]
    %s58 = sld [smem:[#allocation7 + $0x80]]
    %s59 = sld [smem:[#allocation7 + $0x81]]
    %s60 = sld [smem:[#allocation8]]
    %s61 = sld [smem:[#allocation8 + $0x1]]
    %v62 = vstv %s56
    %v63 = vmul.f32 %v52, %v62
    %v64 = vmul.f32 %v53, %v62
    %v65 = vstv %s57
    %v66 = vmul.f32 %v54, %v65
    %v67 = vmul.f32 %v55, %v65
    %v68 = vadd.f32 %v63, %v66
    %v69 = vadd.f32 %v64, %v67
    %v70 = vstv %s60
    %v71 = vadd.f32 %v68, %v70
    %v72 = vadd.f32 %v69, %v70
    %v73 = vstv %s58
    %v74 = vmul.f32 %v52, %v73
    %v75 = vmul.f32 %v53, %v73
    %v76 = vstv %s59
    %v77 = vmul.f32 %v54, %v76
    %v78 = vmul.f32 %v55, %v76
    %v79 = vadd.f32 %v74, %v77
    %v80 = vadd.f32 %v75, %v78
    %v81 = vstv %s61
    %v82 = vadd.f32 %v79, %v81
    %v83 = vadd.f32 %v80, %v81
    %v84 = vmax.f32 %v71, %v82
    %v85 = vmax.f32 %v72, %v83
    %v88 = vrot.slane %v85, 7
    %vm89 = vcmask 1041409
    %v90 = vsel %vm89, %v88, %v84
    %vm92 = vcmask 58368
    %93 = vst.msk [vmem:[#allocation9] sm:$0x3] %vm92, %v90
    // Predicated region
    $region26: #{tpu_custom_call.1} parent=1 // pred_check
      _
    $region27: #{tpu_custom_call.1} parent=1 // pred_check_branch
      %95 = sbr.rel (0) target = $region29
    $region28: #{tpu_custom_call.1} parent=1 // pred_region
      %s97 = ssub.s32 32, 32
      %98 = vsyncadd [#allocation4], %s97
      %s100 = sshll.u32 [#allocation9], 4
      %s101 = int_to_ptr.vmem [resolvable:$true] %s100
      %103 = dma.vmem_to_hbm [thread:$0]  %s101, 32, %s3, [#allocation4]
    $region29: #{tpu_custom_call.1} parent=1 // pred_fallthru
      _
    // Predicated region
    $region30: #{tpu_custom_call.1} parent=1 // pred_check
      _
    $region31: #{tpu_custom_call.1} parent=1 // pred_check_branch
      %105 = sbr.rel (0) target = $region33
    $region32: #{tpu_custom_call.1} parent=1 // pred_region
      %106 = dma.done [#allocation4], 32
    $region33: #{tpu_custom_call.1} parent=1 // pred_fallthru
      _
    %107 = vsyncpa [#allocation3], 1
    %108 = vsyncpa [#allocation4], 1
    %109 = vsyncpa [#allocation5], 1
    %110 = vsyncpa [#allocation6], 1

</llo_original>
